<compile_context>
chip_gen: v5e
topology: v5e:2x2
jax: 0.10.0
libtpu: 0.0.40
codegen_flags: <defaults>
</compile_context>

<pallas_src>
import jax
import jax.numpy as jnp
import numpy as np
from jax.experimental import pallas as pl
from jax.experimental.pallas import tpu as pltpu


# ~4 MiB per block (review recommendation).  With input + output each
# double-buffered that is ~16 MiB of VMEM residency, covered by an explicit
# vmem_limit_bytes below (safe on v5e/v6e 128 MiB and v7x 64 MiB physical).
_TARGET_BLOCK_BYTES = 4 << 20


def _sublane_multiple(itemsize):
    # Packed-sublane count: 8 for 32-bit, 16 for 16-bit, 32 for 8-bit dtypes.
    return 8 * max(1, 4 // int(itemsize))


def _pick_tile_rows(total_rows, bytes_per_row, itemsize):
    """Row-tile size: big (roofline), dtype-aware sublane multiple, >=2 steps."""
    sub = _sublane_multiple(itemsize)
    budget = max(sub, (_TARGET_BLOCK_BYTES // max(bytes_per_row, 1)) // sub * sub)
    if total_rows <= budget:
        # Small problem: aim for exactly 2 grid steps so a v7x megacore can
        # split the stream across both TensorCores (ragged tail handled by
        # Pallas dropping out-of-bounds output rows).
        half = -(-total_rows // 2)          # ceil(total_rows / 2)
        half = -(-half // sub) * sub        # round up to sublane multiple
        if half < total_rows:
            return half
        return total_rows                   # tiny: full-extent single block
    return budget


def _sparsify_threshold_kernel(thr_ref, x_ref, prefix_ref, o_ref):
    # thr_ref:    (1,)            f32 scalar in SMEM (runtime threshold).
    # x_ref:      (tile_rows, D)  VMEM tile of the flattened (B*T, D) input.
    # prefix_ref: (tile_rows, 1)  VMEM column, 1.0 on prefix rows else 0.0.
    # o_ref:      (tile_rows, D)  VMEM output tile (mask in x.dtype).
    x = x_ref[...]
    thr = thr_ref[0].astype(x.dtype)          # compare in x.dtype (matches torch)
    keep = (jnp.abs(x) > thr).astype(x.dtype)
    # Prefix rows are forced to 1; (tile_rows,1) broadcasts across lanes.
    o_ref[...] = jnp.maximum(keep, prefix_ref[...])


def sparsify_fn_threshold(x, threshold):
    """Pallas implementation of SparsifyFn.forward with mask_by='threshold'."""
    B, T, D = x.shape
    half_seq_len = int(0.99 * T)
    prefix_len = T - half_seq_len

    total_rows = B * T
    x2 = x.reshape(total_rows, D)

    itemsize = jnp.dtype(x.dtype).itemsize
    bytes_per_row = D * itemsize
    tile_rows = _pick_tile_rows(total_rows, bytes_per_row, itemsize)
    grid = (pl.cdiv(total_rows, tile_rows),)

    # Per-row prefix indicator (1 for the first `prefix_len` positions of each
    # sequence, 0 otherwise) streamed as a narrow second input: removes all
    # per-tile iota / mod / select work from the kernel for 1/D extra HBM.
    pos = jnp.arange(total_rows, dtype=jnp.int32) % T
    prefix_col = (pos < prefix_len).astype(x.dtype).reshape(total_rows, 1)

    # Runtime scalar threshold in SMEM -> no recompilation when it changes.
    thr = jnp.asarray(threshold, dtype=jnp.float32).reshape((1,))

    block_bytes = tile_rows * bytes_per_row
    try:
        phys_vmem = int(pltpu.get_tpu_info().vmem_capacity_bytes)
    except Exception:  # pragma: no cover - conservative fallback
        phys_vmem = 64 * 1024 * 1024
    # in + out double-buffered (4x block) + indicator + slack, capped well
    # under physical VMEM (64 MiB on v7x).
    vmem_limit = int(min(phys_vmem // 2,
                         max(16 * 1024 * 1024, 4 * block_bytes + (8 << 20))))

    out2 = pl.pallas_call(
        _sparsify_threshold_kernel,
        out_shape=jax.ShapeDtypeStruct((total_rows, D), x.dtype),
        grid_spec=pltpu.PrefetchScalarGridSpec(
            num_scalar_prefetch=0,
            grid=grid,
            in_specs=[
                pl.BlockSpec(memory_space=pltpu.MemorySpace.SMEM),   # threshold
                pl.BlockSpec((tile_rows, D), lambda r: (r, 0)),      # x
                pl.BlockSpec((tile_rows, 1), lambda r: (r, 0)),      # prefix col
            ],
            out_specs=pl.BlockSpec((tile_rows, D), lambda r: (r, 0)),
        ),
        compiler_params=pltpu.CompilerParams(
            dimension_semantics=("parallel",),
            vmem_limit_bytes=vmem_limit,
        ),
        cost_estimate=pl.CostEstimate(
            flops=int(3 * total_rows * D),
            transcendentals=0,
            bytes_accessed=int(2 * total_rows * D * itemsize
                               + total_rows * itemsize),
        ),
    )(thr, x2, prefix_col)
    return out2.reshape(B, T, D)


def _reference(x, threshold):
    # Pure-JAX reference mirroring the PyTorch forward (threshold branch).
    B, T, D = x.shape
    half_seq_len = int(0.99 * T)
    thr = jnp.asarray(threshold, dtype=x.dtype)
    last = x[:, T - half_seq_len:, :]
    last_mask = (jnp.abs(last) > thr).astype(x.dtype)
    ones = jnp.ones_like(x[:, : T - half_seq_len, :])
    return jnp.concatenate([ones, last_mask], axis=1)


def _check(B, T, D, dtype, threshold):
    x = jax.random.normal(jax.random.PRNGKey(0), (B, T, D), dtype=jnp.float32)
    x = x.astype(dtype)
    mask = jax.block_until_ready(sparsify_fn_threshold(x, threshold))
    np.testing.assert_array_equal(np.asarray(mask),
                                  np.asarray(_reference(x, threshold)))
    return mask


if __name__ == "__main__":
    # Deterministic "parameters": SparsifyFn.set_threshold would derive this
    # from a distribution icdf; here we pick a fixed threshold in-script.
    threshold = 0.5

    # Small shape consistent with the module's (batch, seq, hidden) layout.
    mask = _check(B=2, T=16, D=128, dtype=jnp.float32, threshold=threshold)

    # bf16 + non-divisible B*T: exercises dtype-aware sublane rounding and the
    # ragged last tile (Pallas drops out-of-bounds output rows).
    _check(B=1, T=200, D=256, dtype=jnp.bfloat16, threshold=threshold)

    # Larger shape exercising the budget-limited multi-tile path.
    _check(B=2, T=1024, D=1024, dtype=jnp.float32, threshold=threshold)

    # Bookkeeping the module tracks outside the hot path (zero_count / numel /
    # actual_sparsity are running Python-side state, not kernel outputs).
    T = 16
    half_seq_len = int(0.99 * T)
    last_mask = mask[:, T - half_seq_len:, :]
    _actual_sparsity = float(jnp.sum(last_mask == 0)) / last_mask.size

    print("KERNEL_OK")
</pallas_src>

<mosaic_0001>
module attributes {stable_mosaic.version = 11 : i64} {
  func.func @_sparsify_threshold_kernel(%arg0: i32, %arg1: memref<1xf32, #tpu.memory_space<smem>>, %arg2: memref<16x128xf32, #tpu.memory_space<vmem>>, %arg3: memref<16x1xf32, #tpu.memory_space<vmem>>, %arg4: memref<16x128xf32, #tpu.memory_space<vmem>>) attributes {dimension_semantics = [#tpu.dimension_semantics<parallel>], iteration_bounds = array<i64: 2>, scalar_prefetch = 0 : i64, scratch_operands = 0 : i64, tpu.core_type = #tpu.core_type<tc>, window_params = [{transform_indices = @transform_0, window_bounds = array<i64: 1>}, {transform_indices = @transform_1, window_bounds = array<i64: 16, 128>}, {transform_indices = @transform_2, window_bounds = array<i64: 16, 1>}, {transform_indices = @transform_3, window_bounds = array<i64: 16, 128>}]} {
    %c0 = arith.constant 0 : index
    %c0_0 = arith.constant 0 : index
    %0 = vector.load %arg2[%c0, %c0_0] : memref<16x128xf32, #tpu.memory_space<vmem>>, vector<16x128xf32>
    %c0_1 = arith.constant 0 : index
    %1 = memref.load %arg1[%c0_1] : memref<1xf32, #tpu.memory_space<smem>>
    %2 = math.absf %0 : vector<16x128xf32>
    %3 = vector.broadcast %1 : f32 to vector<16x128xf32>
    %4 = arith.cmpf ogt, %2, %3 : vector<16x128xf32>
    %5 = arith.extui %4 : vector<16x128xi1> to vector<16x128xi32>
    %6 = arith.sitofp %5 : vector<16x128xi32> to vector<16x128xf32>
    %c0_2 = arith.constant 0 : index
    %c0_3 = arith.constant 0 : index
    %7 = vector.load %arg3[%c0_2, %c0_3] : memref<16x1xf32, #tpu.memory_space<vmem>>, vector<16x1xf32>
    %8 = vector.broadcast %7 : vector<16x1xf32> to vector<16x128xf32>
    %9 = arith.maximumf %6, %8 : vector<16x128xf32>
    %c0_4 = arith.constant 0 : index
    %c0_5 = arith.constant 0 : index
    %10 = vector.load %arg4[%c0_4, %c0_5] : memref<16x128xf32, #tpu.memory_space<vmem>>, vector<16x128xf32>
    tpu.vector_store %arg4[%c0_4, %c0_5], %9 {strides = array<i32>} : memref<16x128xf32, #tpu.memory_space<vmem>>, vector<16x128xf32>,
    return
  }
  func.func @transform_0(%arg0: i32) -> i32 {
    %c0_i32 = arith.constant 0 : i32
    %c0_i32_0 = arith.constant 0 : i32
    return %c0_i32 : i32
  }
  func.func @transform_1(%arg0: i32) -> (i32, i32) {
    %c0_i32 = arith.constant 0 : i32
    %c0_i32_0 = arith.constant 0 : i32
    return %arg0, %c0_i32 : i32, i32
  }
  func.func @transform_2(%arg0: i32) -> (i32, i32) {
    %c0_i32 = arith.constant 0 : i32
    %c0_i32_0 = arith.constant 0 : i32
    return %arg0, %c0_i32 : i32, i32
  }
  func.func @transform_3(%arg0: i32) -> (i32, i32) {
    %c0_i32 = arith.constant 0 : i32
    %c0_i32_0 = arith.constant 0 : i32
    return %arg0, %c0_i32 : i32, i32
  }
}

</mosaic_0001>

<llo_original>
// kernel: tpu_custom_call.1
$region0: #{tpu_custom_call.1}
  #allocation0 [shape = 'u32[]', space=smem, size = 0x4, offset = 0x4, fixed_abs, tag = 'smem constant byte address 0x4 - core index']
  #allocation1 [shape = 'u32[72,128]{1,0:T(1,128)}', space=vmem, size = 0x9000, scoped, tag = 'internal scratch']
  #allocation2 [shape = 'f32[1]{0:T(128)S(6)}', space=smem, size = 0x200, scoped, tag = 'scoped memory for tpu_custom_call.1']
  %s0 = inlined_call_operand.<no memory space> [shape: f32[1], index: 0, kind: input, shape index: {}]
  %s1 = inlined_call_operand.vmem [shape: f32[32,128], index: 1, kind: input, shape index: {}]
  %s2 = inlined_call_operand.vmem [shape: f32[32,1], index: 2, kind: input, shape index: {}]
  %s3 = inlined_call_operand.hbm [shape: f32[32,128], index: 3, kind: output, shape index: {}]
  %s4 = sld [smem:[#allocation0]]
  $region45: #{tpu_custom_call.1} parent=0
    _
  %s6 = ssub.s32 1, %s4
  %s7 = scalar_select 0, %s6, %s4
  %8 = sst [smem:[#allocation2]] %s0
  $region1: #{tpu_custom_call.1} parent=0
    #allocation3 [shape = 'u8[16384]{0}', space=vmem, size = 0x4000, scoped, tag = 'output window, operand 0']
    #allocation4 [shape = 's32[2]{0}', space=sflag, size = 0x8, scoped, tag = 'scoped memory for tpu_custom_call.1']
    %9 = vsyncpa [#allocation4], 0
    %s10 = scalar_lea.sflag [#allocation4], 1
    %11 = vsyncpa %s10, 0
    loop: start=0, step=1, limit=4
    $region2: #{tpu_custom_call.1} parent=1 // loop_pre_header
      _
    $region3: #{tpu_custom_call.1} parent=1 // loop_header
      %s13 = sphi 0, %s17
      %p14 = scmp.ge.s32.totalorder %s13, 4
      %s21 = sphi 0, %s21
      %s23 = sphi 0, %s21
      %s24 = sphi 0, %s23
      %s38 = sphi 0, %s24
      %s44 = sphi 0, %s46
      %s47 = sphi 0, %s44
      %s48 = sphi 0, %s47
      %s64 = sphi 0, %s48
      %s70 = sphi 0, %s72
      %s73 = sphi 0, %s70
      %s74 = sphi 0, %s73
      %s90 = sphi 0, %s74
      %s96 = sphi 0, %s98
      %s99 = sphi 0, %s96
      %s100 = sphi 0, %s99
      %s116 = sphi 0, %s100
    $region4: #{tpu_custom_call.1} parent=1 // loop_header_branch
      %16 = sbr.rel (%p14) target = $region8
    $region5: #{tpu_custom_call.1} parent=1 // loop_body
      %s18 = ssub.s32 %s13, 1
      %s19 = ssub.s32 %s13, 2
      %s20 = sadd.s32 %s13, 1
      %s22 = sadd.s32 %s21, 1
      %p25 = scmp.eq.s32.totalorder %s13, 1
      %p26 = scmp.ne.s32.totalorder %s21, %s23
      %p27 = scmp.eq.s32.totalorder %s13, 0
      %p28 = por %p26, %p27
      %p29 = scmp.ne.s32.totalorder %s21, %s23
      %p30 = scmp.eq.s32.totalorder %s18, 1
      %p31 = por %p29, %p30
      %p32 = scmp.ne.s32.totalorder %s23, %s24
      %p33 = scmp.eq.s32.totalorder %s18, 0
      %p34 = por %p32, %p33
      %p35 = scmp.ne.s32.totalorder %s23, %s24
      %p36 = scmp.eq.s32.totalorder %s19, 1
      %p37 = por %p35, %p36
      %p39 = scmp.ne.s32.totalorder %s24, %s38
      %p40 = scmp.eq.s32.totalorder %s19, 0
      %p41 = por %p39, %p40
      %s42 = ssub.s32 %s13, %s20
      %p43 = scmp.eq.s32.totalorder %s42, 0
      %s45 = sadd.s32 %s44, 1
      %s46 = scalar_select %p43, %s44, %s45
      %p49 = pneg %p43
      %p50 = scmp.eq.s32.totalorder %s13, 1
      %p51 = por %p49, %p50
      %p52 = scmp.ne.s32.totalorder %s44, %s47
      %p53 = scmp.eq.s32.totalorder %s13, 0
      %p54 = por %p52, %p53
      %p55 = scmp.ne.s32.totalorder %s44, %s47
      %p56 = scmp.eq.s32.totalorder %s18, 1
      %p57 = por %p55, %p56
      %p58 = scmp.ne.s32.totalorder %s47, %s48
      %p59 = scmp.eq.s32.totalorder %s18, 0
      %p60 = por %p58, %p59
      %p61 = scmp.ne.s32.totalorder %s47, %s48
      %p62 = scmp.eq.s32.totalorder %s19, 1
      %p63 = por %p61, %p62
      %p65 = scmp.ne.s32.totalorder %s48, %s64
      %p66 = scmp.eq.s32.totalorder %s19, 0
      %p67 = por %p65, %p66
      %s68 = ssub.s32 %s13, %s20
      %p69 = scmp.eq.s32.totalorder %s68, 0
      %s71 = sadd.s32 %s70, 1
      %s72 = scalar_select %p69, %s70, %s71
      %p75 = pneg %p69
      %p76 = scmp.eq.s32.totalorder %s13, 1
      %p77 = por %p75, %p76
      %p78 = scmp.ne.s32.totalorder %s70, %s73
      %p79 = scmp.eq.s32.totalorder %s13, 0
      %p80 = por %p78, %p79
      %p81 = scmp.ne.s32.totalorder %s70, %s73
      %p82 = scmp.eq.s32.totalorder %s18, 1
      %p83 = por %p81, %p82
      %p84 = scmp.ne.s32.totalorder %s73, %s74
      %p85 = scmp.eq.s32.totalorder %s18, 0
      %p86 = por %p84, %p85
      %p87 = scmp.ne.s32.totalorder %s73, %s74
      %p88 = scmp.eq.s32.totalorder %s19, 1
      %p89 = por %p87, %p88
      %p91 = scmp.ne.s32.totalorder %s74, %s90
      %p92 = scmp.eq.s32.totalorder %s19, 0
      %p93 = por %p91, %p92
      %s94 = ssub.s32 %s13, %s20
      %p95 = scmp.eq.s32.totalorder %s94, 0
      %s97 = sadd.s32 %s96, 1
      %s98 = scalar_select %p95, %s96, %s97
      %p101 = pneg %p95
      %p102 = scmp.eq.s32.totalorder %s13, 1
      %p103 = por %p101, %p102
      %p104 = scmp.ne.s32.totalorder %s96, %s99
      %p105 = scmp.eq.s32.totalorder %s13, 0
      %p106 = por %p104, %p105
      %p107 = scmp.ne.s32.totalorder %s96, %s99
      %p108 = scmp.eq.s32.totalorder %s18, 1
      %p109 = por %p107, %p108
      %p110 = scmp.ne.s32.totalorder %s99, %s100
      %p111 = scmp.eq.s32.totalorder %s18, 0
      %p112 = por %p110, %p111
      %p113 = scmp.ne.s32.totalorder %s99, %s100
      %p114 = scmp.eq.s32.totalorder %s19, 1
      %p115 = por %p113, %p114
      %p117 = scmp.ne.s32.totalorder %s100, %s116
      %p118 = scmp.eq.s32.totalorder %s19, 0
      %p119 = por %p117, %p118
      %p120 = scmp.le.s32.totalorder 1, %s13
      %p121 = scmp.lt.s32.totalorder %s13, 3
      %p122 = pnand %p120, %p121
      %p123 = pneg %p122
      // Predicated region
      $region9: #{tpu_custom_call.1} parent=5 // pred_check
        _
      $region10: #{tpu_custom_call.1} parent=5 // pred_check_branch
        %125 = sbr.rel (%p122) target = $region12
      $region11: #{tpu_custom_call.1} parent=5 // pred_region
        %s126 = ssub.s32 %s13, 1
        // Predicated region
        $region13: #{tpu_custom_call.1} parent=11 // pred_check
          %p127 = pneg %p34
        $region14: #{tpu_custom_call.1} parent=11 // pred_check_branch
          %129 = sbr.rel (%p127) target = $region16
        $region15: #{tpu_custom_call.1} parent=11 // pred_region
          _
        $region16: #{tpu_custom_call.1} parent=11 // pred_fallthru
          _
      $region12: #{tpu_custom_call.1} parent=5 // pred_fallthru
        _
      %p130 = scmp.lt.s32.totalorder %s13, 2
      // Predicated region
      $region17: #{tpu_custom_call.1} parent=5 // pred_check
        %p131 = pneg %p130
      $region18: #{tpu_custom_call.1} parent=5 // pred_check_branch
        %133 = sbr.rel (%p131) target = $region20
      $region19: #{tpu_custom_call.1} parent=5 // pred_region
        // Predicated region
        $region21: #{tpu_custom_call.1} parent=19 // pred_check
          %p134 = pneg %p54
        $region22: #{tpu_custom_call.1} parent=19 // pred_check_branch
          %136 = sbr.rel (%p134) target = $region24
        $region23: #{tpu_custom_call.1} parent=19 // pred_region
          %s137 = smul.u32 2, %s13
          %p138 = scmp.lt.s32.totalorder %s137, 3
          %s139 = scalar_select %p138, %s137, 3
          %s140 = smul.addr %s139, 8
          %s141 = scalar_lea.vmem %s1, %s140
          %s142 = smul.u32 2, %s13
        $region24: #{tpu_custom_call.1} parent=19 // pred_fallthru
          _
        // Predicated region
        $region25: #{tpu_custom_call.1} parent=19 // pred_check
          %p143 = pneg %p80
        $region26: #{tpu_custom_call.1} parent=19 // pred_check_branch
          %145 = sbr.rel (%p143) target = $region28
        $region27: #{tpu_custom_call.1} parent=19 // pred_region
          %s146 = smul.u32 2, %s13
          %p147 = scmp.lt.s32.totalorder %s146, 3
          %s148 = scalar_select %p147, %s146, 3
          %s149 = smul.addr %s148, 8
          %s150 = scalar_lea.vmem %s2, %s149
          %s151 = smul.u32 2, %s13
        $region28: #{tpu_custom_call.1} parent=19 // pred_fallthru
          _
      $region20: #{tpu_custom_call.1} parent=5 // pred_fallthru
        _
      %p152 = scmp.le.s32.totalorder 1, %s13
      %p153 = scmp.lt.s32.totalorder %s13, 3
      %p154 = pnand %p152, %p153
      %p155 = pneg %p154
      // Predicated region
      $region29: #{tpu_custom_call.1} parent=5 // pred_check
        _
      $region30: #{tpu_custom_call.1} parent=5 // pred_check_branch
        %157 = sbr.rel (%p154) target = $region32
      $region31: #{tpu_custom_call.1} parent=5 // pred_region
        %s158 = ssub.s32 %s13, 1
        %p159 = pneg %p34
        %p160 = pneg %p31
        %s161 = smul.u32 2, %s18
        %p162 = scmp.lt.s32.totalorder %s161, 3
        %s163 = scalar_select %p162, %s161, 3
        %s164 = smul.addr %s163, 8
        %s165 = scalar_lea.vmem %s1, %s164
        %p166 = pneg %p60
        %p167 = pneg %p57
        %s168 = smul.u32 2, %s18
        %p169 = scmp.lt.s32.totalorder %s168, 3
        %s170 = scalar_select %p169, %s168, 3
        %s171 = smul.addr %s170, 8
        %s172 = scalar_lea.vmem %s2, %s171
        %p173 = pneg %p86
        %p174 = pneg %p83
        %p175 = pneg %p112
        %p176 = pneg %p109
        %s177 = sand.u32 %s99, 1
        %s178 = scalar_lea.sflag [#allocation4], %s177
        %s179 = sand.u32 %s99, 1
        %s180 = smul.addr %s179, 16
        %s181 = scalar_lea.vmem [#allocation3], %s180
        %s182 = smul.u32 2, %s18
        %p183 = scmp.lt.s32.totalorder %s182, 3
        %s184 = scalar_select %p183, %s182, 3
        %s185 = smul.addr %s184, 8
        %s186 = scalar_lea.vmem %s1, %s185
        %s187 = smul.u32 2, %s18
        %s188 = smul.u32 2, %s18
        %p189 = scmp.lt.s32.totalorder %s188, 3
        %s190 = scalar_select %p189, %s188, 3
        %s191 = smul.addr %s190, 8
        %s192 = scalar_lea.vmem %s2, %s191
        %s193 = smul.u32 2, %s18
        %s194 = smul.u32 2, %s18
        %v195 = vld [vmem:[%s186] sm:$0xff]
        %v196 = vld [vmem:[%s186 + $0x8] sm:$0xff]
        %s197 = sld [smem:[#allocation2]]
        %v198 = vand.u32 2147483647, %v195
        %v199 = vand.u32 2147483647, %v196
        %v200 = vstv %s197
        %vm201 = vcmp.gt.f32.partialorder %v198, %v200
        %vm202 = vcmp.gt.f32.partialorder %v199, %v200
        %v203 = vsel %vm201, 1, 0
        %v204 = vsel %vm202, 1, 0
        %v205 = vcvt.s32.f32 %v203
        %v206 = vcvt.s32.f32 %v204
        %v207 = vld [vmem:[%s192] sm:$0xff]
        %v208 = vld [vmem:[%s192 + $0x8] sm:$0xff]
        %210 = vset.pattern.permute.xlu0 0
        %211 = vperm.xlu0 %210, %v207
        %v212 = vpop.permute.xlu0 %211
        %215 = vset.pattern.permute.xlu0 0
        %216 = vperm.xlu0 %215, %v208
        %v217 = vpop.permute.xlu0 %216
        %v219 = vmax.f32 %v205, %v212
        %v220 = vmax.f32 %v206, %v217
        %221 = vst [vmem:[%s181] sm:$0xff] %v219
        %222 = vst [vmem:[%s181 + $0x8] sm:$0xff] %v220
        %s223 = sand.u32 %s99, 1
        %s224 = scalar_lea.sflag [#allocation4], %s223
        %s225 = sand.u32 %s99, 1
        %s226 = smul.addr %s225, 16
        %s227 = scalar_lea.vmem [#allocation3], %s226
        // Predicated region
        $region33: #{tpu_custom_call.1} parent=31 // pred_check
          %p228 = pneg %p109
        $region34: #{tpu_custom_call.1} parent=31 // pred_check_branch
          %230 = sbr.rel (%p228) target = $region36
        $region35: #{tpu_custom_call.1} parent=31 // pred_region
          %s231 = smul.u32 2, %s18
          %233 = vsyncadd %s224, 0
          %s234 = smul.addr %s231, 8
          %s235 = scalar_lea.hbm %s3, %s234
          %s236 = sshll.u32 %s227, 4
          %s237 = int_to_ptr.vmem [resolvable:$true] %s236
          %s238 = sshll.u32 %s235, 4
          %s239 = int_to_ptr.hbm [resolvable:$true] %s238
          %244 = dma.vmem_to_hbm [thread:$0]  %s237, 256, %s239, %s224, 128, 128, 8
        $region36: #{tpu_custom_call.1} parent=31 // pred_fallthru
          _
      $region32: #{tpu_custom_call.1} parent=5 // pred_fallthru
        _
      %p245 = scmp.le.s32.totalorder 2, %s13
      // Predicated region
      $region37: #{tpu_custom_call.1} parent=5 // pred_check
        %p246 = pneg %p245
      $region38: #{tpu_custom_call.1} parent=5 // pred_check_branch
        %248 = sbr.rel (%p246) target = $region40
      $region39: #{tpu_custom_call.1} parent=5 // pred_region
        %s249 = ssub.s32 %s13, 2
        // Predicated region
        $region41: #{tpu_custom_call.1} parent=39 // pred_check
          %p250 = pneg %p115
        $region42: #{tpu_custom_call.1} parent=39 // pred_check_branch
          %252 = sbr.rel (%p250) target = $region44
        $region43: #{tpu_custom_call.1} parent=39 // pred_region
          %s253 = sand.u32 %s100, 1
          %s254 = scalar_lea.sflag [#allocation4], %s253
          %s255 = sand.u32 %s100, 1
          %s256 = smul.addr %s255, 16
          %s257 = scalar_lea.vmem [#allocation3], %s256
          %259 = dma.done %s254, 256
        $region44: #{tpu_custom_call.1} parent=39 // pred_fallthru
          _
      $region40: #{tpu_custom_call.1} parent=5 // pred_fallthru
        _
    $region6: #{tpu_custom_call.1} parent=1 // loop_footer
      %s17 = sadd.s32 1, %s13
    $region7: #{tpu_custom_call.1} parent=1 // loop_footer_branch
      %12 = sbr.rel target = $region3
    $region8: #{tpu_custom_call.1} parent=1 // loop_exit
      _
    %260 = vsyncpa [#allocation4], 1
    %s261 = scalar_lea.sflag [#allocation4], 1
    %262 = vsyncpa %s261, 1

</llo_original>
